<compile_context>
chip_gen: v7x
topology: tpu7x:2x2x1
jax: 0.10.0
libtpu: 0.0.40
codegen_flags: <defaults>
</compile_context>

<pallas_src>
import jax
import jax.numpy as jnp
from jax.experimental import pallas as pl
from jax.experimental.pallas import tpu as pltpu


def _round_up(x, m):
    return ((x + m - 1) // m) * m


def mlp_kernel(x_ref, w1_ref, b1_ref, w2_ref, b2_ref, o_ref):
    # fc1 (lane-packed): (M, pack*in) @ (pack*in, pack*hidden) on the MXU,
    # f32 accumulate.
    h = jnp.dot(x_ref[...], w1_ref[...], preferred_element_type=jnp.float32)
    # Bias + Tanh on VPU/EUP over a fully lane-dense tile (f32: v5e-safe).
    h = jnp.tanh(h + b1_ref[...])
    # fc3 (lane-packed block-diagonal): (M, pack*hidden) @ (pack*hidden, pack).
    y = jnp.dot(h, w2_ref[...], preferred_element_type=jnp.float32)
    # b2 is a scalar read from SMEM.
    o_ref[...] = (y + b2_ref[0, 0]).astype(o_ref.dtype)


def regression_model_forward(x, w1, b1, w2, b2, *, tile_b=8192):
    """x: (B, input_size) f32; w1: (in, hidden); b1: (1, hidden) or (hidden,);
    w2: (hidden, 1) or (hidden,); b2: scalar-like.  Returns (B, 1) f32."""
    B, input_size = x.shape
    hidden = w1.shape[1]
    w1 = jnp.asarray(w1, jnp.float32)
    b1 = jnp.asarray(b1, jnp.float32).reshape(1, hidden)
    w2v = jnp.asarray(w2, jnp.float32).reshape(hidden)
    b2 = jnp.asarray(b2, jnp.float32).reshape(1, 1)

    # Lane-packing factor: fold `pack` batch rows into one lane row so the x
    # tile, the tanh tile and the output tile are lane-dense.
    if input_size <= 128 and 128 % input_size == 0:
        pack = min(8, 128 // input_size)
    else:
        pack = 1  # fallback: still correct, just lane-padded

    # Batch tile: multiple of the sublane/packing granularity; stream large
    # batches in TILE_B-row chunks, cap at the (rounded-up) batch itself.
    gran = 8 * pack
    TILE_B = min(_round_up(tile_b, gran), _round_up(B, gran))
    B_pad = _round_up(B, TILE_B)
    if B_pad != B:
        x = jnp.pad(x, ((0, B_pad - B), (0, 0)))

    # Free contiguous reshape: (B_pad, in) -> (B_pad//pack, pack*in).
    x_packed = x.reshape(B_pad // pack, pack * input_size)

    # Block-diagonal packed weights (tiny, built once per call):
    #   W1_big[r*in+i, r*hid+j] = w1[i, j];  W2_big[r*hid+j, r] = w2[j]
    eye = jnp.eye(pack, dtype=jnp.float32)
    w1_big = jnp.einsum("rs,ij->risj", eye, w1).reshape(
        pack * input_size, pack * hidden)
    b1_big = jnp.tile(b1, (1, pack))
    w2_big = jnp.einsum("rs,j->rjs", eye, w2v).reshape(pack * hidden, pack)

    M_tile = TILE_B // pack
    grid = (B_pad // TILE_B,)
    out = pl.pallas_call(
        mlp_kernel,
        out_shape=jax.ShapeDtypeStruct((B_pad // pack, pack), jnp.float32),
        grid=grid,
        in_specs=[
            # streamed per grid step (lane-dense x slab)
            pl.BlockSpec((M_tile, pack * input_size), lambda i: (i, 0)),
            # weights / biases: VMEM-resident, DMA'd once (block (0,0) always)
            pl.BlockSpec((pack * input_size, pack * hidden), lambda i: (0, 0)),
            pl.BlockSpec((1, pack * hidden), lambda i: (0, 0)),
            pl.BlockSpec((pack * hidden, pack), lambda i: (0, 0)),
            # scalar bias via the scalar path
            pl.BlockSpec((1, 1), lambda i: (0, 0), memory_space=pltpu.SMEM),
        ],
        out_specs=pl.BlockSpec((M_tile, pack), lambda i: (i, 0)),
        compiler_params=pltpu.CompilerParams(
            dimension_semantics=("parallel",),
        ),
    )(x_packed, w1_big, b1_big, w2_big, b2)
    # Free contiguous reshape back to the module's (B, 1) output.
    return out.reshape(B_pad, 1)[:B]


def init_params(key, input_size, hidden_size):
    """Deterministic init mirroring nn.Linear default U[-1/sqrt(fan_in), 1/sqrt(fan_in)]."""
    k1, k2, k3, k4 = jax.random.split(key, 4)
    bound1 = 1.0 / jnp.sqrt(jnp.float32(input_size))
    bound2 = 1.0 / jnp.sqrt(jnp.float32(hidden_size))
    # fc1 weight stored pre-transposed as (in, hidden).
    w1 = jax.random.uniform(k1, (input_size, hidden_size), jnp.float32, -bound1, bound1)
    b1 = jax.random.uniform(k2, (1, hidden_size), jnp.float32, -bound1, bound1)
    w2 = jax.random.uniform(k3, (hidden_size, 1), jnp.float32, -bound2, bound2)
    b2 = jax.random.uniform(k4, (1, 1), jnp.float32, -bound2, bound2)
    return w1, b1, w2, b2


def _reference(x, w1, b1, w2, b2):
    return jnp.tanh(x @ w1 + b1) @ w2 + b2


if __name__ == "__main__":
    input_size, hidden_size = 16, 32

    key = jax.random.PRNGKey(0)
    kx, kp, kx2 = jax.random.split(key, 3)
    w1, b1, w2, b2 = init_params(kp, input_size, hidden_size)

    # Small-shape check (single grid step, packed path).
    batch = 8
    x = jax.random.normal(kx, (batch, input_size), jnp.float32)
    out = jax.block_until_ready(regression_model_forward(x, w1, b1, w2, b2))
    ref = _reference(x, w1, b1, w2, b2)
    assert out.shape == (batch, 1)
    assert jnp.allclose(out, ref, atol=1e-5, rtol=1e-5)

    # Non-multiple-of-granularity batch exercises the padding / slicing path
    # and the resident-weight streaming setup.
    big_batch = 1037
    x_big = jax.random.normal(kx2, (big_batch, input_size), jnp.float32)
    out_big = jax.block_until_ready(regression_model_forward(x_big, w1, b1, w2, b2))
    ref_big = _reference(x_big, w1, b1, w2, b2)
    assert out_big.shape == (big_batch, 1)
    assert jnp.allclose(out_big, ref_big, atol=1e-5, rtol=1e-5)

    print("KERNEL_OK")
</pallas_src>

<mosaic_0001>
module attributes {stable_mosaic.version = 11 : i64} {
  func.func @mlp_kernel(%arg0: i32, %arg1: memref<8x128xf32, #tpu.memory_space<vmem>>, %arg2: memref<128x256xf32, #tpu.memory_space<vmem>>, %arg3: memref<1x256xf32, #tpu.memory_space<vmem>>, %arg4: memref<256x8xf32, #tpu.memory_space<vmem>>, %arg5: memref<1x1xf32, #tpu.memory_space<smem>>, %arg6: memref<8x8xf32, #tpu.memory_space<vmem>>) attributes {dimension_semantics = [#tpu.dimension_semantics<parallel>], iteration_bounds = array<i64: 1>, scalar_prefetch = 0 : i64, scratch_operands = 0 : i64, tpu.core_type = #tpu.core_type<tc>, window_params = [{transform_indices = @transform_0, window_bounds = array<i64: 8, 128>}, {pipeline_mode = #tpu.pipeline_mode<synchronous>, transform_indices = @transform_1, window_bounds = array<i64: 128, 256>}, {pipeline_mode = #tpu.pipeline_mode<synchronous>, transform_indices = @transform_2, window_bounds = array<i64: 1, 256>}, {pipeline_mode = #tpu.pipeline_mode<synchronous>, transform_indices = @transform_3, window_bounds = array<i64: 256, 8>}, {transform_indices = @transform_4, window_bounds = array<i64: 1, 1>}, {transform_indices = @transform_5, window_bounds = array<i64: 8, 8>}]} {
    %c0 = arith.constant 0 : index
    %c0_0 = arith.constant 0 : index
    %0 = vector.load %arg1[%c0, %c0_0] : memref<8x128xf32, #tpu.memory_space<vmem>>, vector<8x128xf32>
    %c0_1 = arith.constant 0 : index
    %c0_2 = arith.constant 0 : index
    %1 = vector.load %arg2[%c0_1, %c0_2] : memref<128x256xf32, #tpu.memory_space<vmem>>, vector<128x256xf32>
    %cst = arith.constant dense<0.000000e+00> : vector<8x256xf32>
    %2 = tpu.matmul %0, %1, %cst {dimension_numbers = #tpu.dot_dimension_numbers<[1], [0], [0], [1], [0, 0, 1, 1], [], []>} : vector<8x128xf32>, vector<128x256xf32>, vector<8x256xf32> -> vector<8x256xf32>
    %c0_3 = arith.constant 0 : index
    %c0_4 = arith.constant 0 : index
    %3 = vector.load %arg3[%c0_3, %c0_4] : memref<1x256xf32, #tpu.memory_space<vmem>>, vector<1x256xf32>
    %4 = vector.broadcast %3 : vector<1x256xf32> to vector<8x256xf32>
    %5 = arith.addf %2, %4 : vector<8x256xf32>
    %6 = math.tanh %5 : vector<8x256xf32>
    %c0_5 = arith.constant 0 : index
    %c0_6 = arith.constant 0 : index
    %7 = vector.load %arg4[%c0_5, %c0_6] : memref<256x8xf32, #tpu.memory_space<vmem>>, vector<256x8xf32>
    %cst_7 = arith.constant dense<0.000000e+00> : vector<8x8xf32>
    %8 = tpu.matmul %6, %7, %cst_7 {dimension_numbers = #tpu.dot_dimension_numbers<[1], [0], [0], [1], [0, 0, 1, 1], [], []>} : vector<8x256xf32>, vector<256x8xf32>, vector<8x8xf32> -> vector<8x8xf32>
    %c0_8 = arith.constant 0 : index
    %c0_9 = arith.constant 0 : index
    %9 = memref.load %arg5[%c0_8, %c0_9] : memref<1x1xf32, #tpu.memory_space<smem>>
    %10 = vector.broadcast %9 : f32 to vector<8x8xf32>
    %11 = arith.addf %8, %10 : vector<8x8xf32>
    %c0_10 = arith.constant 0 : index
    %c0_11 = arith.constant 0 : index
    %12 = vector.load %arg6[%c0_10, %c0_11] : memref<8x8xf32, #tpu.memory_space<vmem>>, vector<8x8xf32>
    tpu.vector_store %arg6[%c0_10, %c0_11], %11 {strides = array<i32>} : memref<8x8xf32, #tpu.memory_space<vmem>>, vector<8x8xf32>,
    return
  }
  func.func @transform_0(%arg0: i32) -> (i32, i32) {
    %c0_i32 = arith.constant 0 : i32
    %c0_i32_0 = arith.constant 0 : i32
    return %arg0, %c0_i32 : i32, i32
  }
  func.func @transform_1(%arg0: i32) -> (i32, i32) {
    %c0_i32 = arith.constant 0 : i32
    %c0_i32_0 = arith.constant 0 : i32
    %c0_i32_1 = arith.constant 0 : i32
    return %c0_i32, %c0_i32_0 : i32, i32
  }
  func.func @transform_2(%arg0: i32) -> (i32, i32) {
    %c0_i32 = arith.constant 0 : i32
    %c0_i32_0 = arith.constant 0 : i32
    %c0_i32_1 = arith.constant 0 : i32
    return %c0_i32, %c0_i32_0 : i32, i32
  }
  func.func @transform_3(%arg0: i32) -> (i32, i32) {
    %c0_i32 = arith.constant 0 : i32
    %c0_i32_0 = arith.constant 0 : i32
    %c0_i32_1 = arith.constant 0 : i32
    return %c0_i32, %c0_i32_0 : i32, i32
  }
  func.func @transform_4(%arg0: i32) -> (i32, i32) {
    %c0_i32 = arith.constant 0 : i32
    %c0_i32_0 = arith.constant 0 : i32
    %c0_i32_1 = arith.constant 0 : i32
    return %c0_i32, %c0_i32_0 : i32, i32
  }
  func.func @transform_5(%arg0: i32) -> (i32, i32) {
    %c0_i32 = arith.constant 0 : i32
    %c0_i32_0 = arith.constant 0 : i32
    return %arg0, %c0_i32 : i32, i32
  }
}

</mosaic_0001>

<llo_original>
// kernel: tpu_custom_call.1
$region0: #{tpu_custom_call.1}
  #allocation0 [shape = 'u32[]', space=smem, size = 0x4, offset = 0x4, fixed_abs, tag = 'smem constant byte address 0x4 - core index']
  #allocation1 [shape = 'u32[144,128]{1,0:T(1,128)}', space=vmem, size = 0x12000, scoped, tag = 'internal scratch']
  #allocation2 [shape = 'f32[1,1]{1,0:T(1,128)S(6)}', space=smem, size = 0x200, scoped, tag = 'scoped memory for tpu_custom_call.1']
  %s0 = inlined_call_operand.vmem [shape: f32[8,128], index: 0, kind: input, shape index: {}]
  %s1 = inlined_call_operand.vmem [shape: f32[128,256], index: 1, kind: input, shape index: {}]
  %s2 = inlined_call_operand.vmem [shape: f32[1,256], index: 2, kind: input, shape index: {}]
  %s3 = inlined_call_operand.vmem [shape: f32[256,8], index: 3, kind: input, shape index: {}]
  %s4 = inlined_call_operand.<no memory space> [shape: f32[1,1], index: 4, kind: input, shape index: {}]
  %s5 = inlined_call_operand.hbm [shape: f32[8,8], index: 5, kind: output, shape index: {}]
  %s6 = sld [smem:[#allocation0]]
  $region30: #{tpu_custom_call.1} parent=0
    _
  %s8 = ssub.s32 1, %s6
  %s9 = scalar_select 0, %s8, %s6
  %10 = sst [smem:[#allocation2]] %s4
  $region1: #{tpu_custom_call.1} parent=0
    #allocation3 [shape = 'u8[4096]{0}', space=vmem, size = 0x1000, scoped, tag = 'output window, operand 0, single buffered']
    #allocation4 [shape = 's32[1]{0}', space=sflag, size = 0x4, scoped, tag = 'scoped memory for tpu_custom_call.1']
    %11 = vsyncpa [#allocation4], 0
    // Predicated region
    $region2: #{tpu_custom_call.1} parent=1 // pred_check
      _
    $region3: #{tpu_custom_call.1} parent=1 // pred_check_branch
      %13 = sbr.rel (0) target = $region5
    $region4: #{tpu_custom_call.1} parent=1 // pred_region
      _
    $region5: #{tpu_custom_call.1} parent=1 // pred_fallthru
      _
    // Predicated region
    $region6: #{tpu_custom_call.1} parent=1 // pred_check
      _
    $region7: #{tpu_custom_call.1} parent=1 // pred_check_branch
      %15 = sbr.rel (0) target = $region9
    $region8: #{tpu_custom_call.1} parent=1 // pred_region
      _
    $region9: #{tpu_custom_call.1} parent=1 // pred_fallthru
      _
    // Predicated region
    $region10: #{tpu_custom_call.1} parent=1 // pred_check
      _
    $region11: #{tpu_custom_call.1} parent=1 // pred_check_branch
      %17 = sbr.rel (0) target = $region13
    $region12: #{tpu_custom_call.1} parent=1 // pred_region
      _
    $region13: #{tpu_custom_call.1} parent=1 // pred_fallthru
      _
    // Predicated region
    $region14: #{tpu_custom_call.1} parent=1 // pred_check
      _
    $region15: #{tpu_custom_call.1} parent=1 // pred_check_branch
      %19 = sbr.rel (0) target = $region17
    $region16: #{tpu_custom_call.1} parent=1 // pred_region
      _
    $region17: #{tpu_custom_call.1} parent=1 // pred_fallthru
      _
    // Predicated region
    $region18: #{tpu_custom_call.1} parent=1 // pred_check
      _
    $region19: #{tpu_custom_call.1} parent=1 // pred_check_branch
      %21 = sbr.rel (0) target = $region21
    $region20: #{tpu_custom_call.1} parent=1 // pred_region
      _
    $region21: #{tpu_custom_call.1} parent=1 // pred_fallthru
      _
    %v22 = vld [vmem:[%s0] sm:$0xff]
    %v23 = vld [vmem:[%s1] sm:$0xff]
    %v24 = vld [vmem:[%s1 + $0x8] sm:$0xff]
    %v25 = vld [vmem:[%s1 + $0x10] sm:$0xff]
    %v26 = vld [vmem:[%s1 + $0x18] sm:$0xff]
    %v27 = vld [vmem:[%s1 + $0x20] sm:$0xff]
    %v28 = vld [vmem:[%s1 + $0x28] sm:$0xff]
    %v29 = vld [vmem:[%s1 + $0x30] sm:$0xff]
    %v30 = vld [vmem:[%s1 + $0x38] sm:$0xff]
    %v31 = vld [vmem:[%s1 + $0x40] sm:$0xff]
    %v32 = vld [vmem:[%s1 + $0x48] sm:$0xff]
    %v33 = vld [vmem:[%s1 + $0x50] sm:$0xff]
    %v34 = vld [vmem:[%s1 + $0x58] sm:$0xff]
    %v35 = vld [vmem:[%s1 + $0x60] sm:$0xff]
    %v36 = vld [vmem:[%s1 + $0x68] sm:$0xff]
    %v37 = vld [vmem:[%s1 + $0x70] sm:$0xff]
    %v38 = vld [vmem:[%s1 + $0x78] sm:$0xff]
    %v39 = vld [vmem:[%s1 + $0x80] sm:$0xff]
    %v40 = vld [vmem:[%s1 + $0x88] sm:$0xff]
    %v41 = vld [vmem:[%s1 + $0x90] sm:$0xff]
    %v42 = vld [vmem:[%s1 + $0x98] sm:$0xff]
    %v43 = vld [vmem:[%s1 + $0xa0] sm:$0xff]
    %v44 = vld [vmem:[%s1 + $0xa8] sm:$0xff]
    %v45 = vld [vmem:[%s1 + $0xb0] sm:$0xff]
    %v46 = vld [vmem:[%s1 + $0xb8] sm:$0xff]
    %v47 = vld [vmem:[%s1 + $0xc0] sm:$0xff]
    %v48 = vld [vmem:[%s1 + $0xc8] sm:$0xff]
    %v49 = vld [vmem:[%s1 + $0xd0] sm:$0xff]
    %v50 = vld [vmem:[%s1 + $0xd8] sm:$0xff]
    %v51 = vld [vmem:[%s1 + $0xe0] sm:$0xff]
    %v52 = vld [vmem:[%s1 + $0xe8] sm:$0xff]
    %v53 = vld [vmem:[%s1 + $0xf0] sm:$0xff]
    %v54 = vld [vmem:[%s1 + $0xf8] sm:$0xff]
    %v55 = vld [vmem:[%s2] sm:$0x3]
    %v57 = vlaneseq
    %v58 = vshrl.u32 %v57, 7
    %v59 = vsub.s32 0, %v58
    %v60 = vrot.slane %v55, %v59
    %v61 = vlaneseq
    %v62 = vshrl.u32 %v61, 7
    %v63 = vsub.s32 1, %v62
    %v64 = vrot.slane %v55, %v63
    %67 = vmatprep.subr.mxu0 %v24
    %68 = vmatpush1.msra.mxu0 %v23
    %69 = vmatprep.subr.mxu0 %v26
    %70 = vmatpush1.msra.mxu0 %v25
    %71 = vmatprep.subr.mxu0 %v28
    %72 = vmatpush1.msra.mxu0 %v27
    %73 = vmatprep.subr.mxu0 %v30
    %74 = vmatpush1.msra.mxu0 %v29
    %75 = vmatprep.subr.mxu0 %v32
    %76 = vmatpush1.msra.mxu0 %v31
    %77 = vmatprep.subr.mxu0 %v34
    %78 = vmatpush1.msra.mxu0 %v33
    %79 = vmatprep.subr.mxu0 %v36
    %80 = vmatpush1.msra.mxu0 %v35
    %81 = vmatprep.subr.mxu0 %v38
    %82 = vmatpush1.msra.mxu0 %v37
    %83 = vmatprep.subr.mxu0 %v40
    %84 = vmatpush1.msra.mxu0 %v39
    %85 = vmatprep.subr.mxu0 %v42
    %86 = vmatpush1.msra.mxu0 %v41
    %87 = vmatprep.subr.mxu0 %v44
    %88 = vmatpush1.msra.mxu0 %v43
    %89 = vmatprep.subr.mxu0 %v46
    %90 = vmatpush1.msra.mxu0 %v45
    %91 = vmatprep.subr.mxu0 %v48
    %92 = vmatpush1.msra.mxu0 %v47
    %93 = vmatprep.subr.mxu0 %v50
    %94 = vmatpush1.msra.mxu0 %v49
    %95 = vmatprep.subr.mxu0 %v52
    %96 = vmatpush1.msra.mxu0 %v51
    %97 = vmatprep.subr.mxu0 %v54
    %98 = vmatpush1.msra.mxu0 %v53
    %99 = vmatprep.subr.mxu0 0.0
    %100 = vmatpush1.msra.mxu0 0.0
    %101 = vmatprep.subr.mxu0 0.0
    %102 = vmatpush1.msra.mxu0 0.0
    %103 = vmatprep.subr.mxu0 0.0
    %104 = vmatpush1.msra.mxu0 0.0
    %105 = vmatprep.subr.mxu0 0.0
    %106 = vmatpush1.msra.mxu0 0.0
    %107 = vmatprep.subr.mxu0 0.0
    %108 = vmatpush1.msra.mxu0 0.0
    %109 = vmatprep.subr.mxu0 0.0
    %110 = vmatpush1.msra.mxu0 0.0
    %111 = vmatprep.subr.mxu0 0.0
    %112 = vmatpush1.msra.mxu0 0.0
    %113 = vmatprep.subr.mxu0 0.0
    %114 = vmatpush1.msra.mxu0 0.0
    %115 = vmatprep.subr.mxu0 0.0
    %116 = vmatpush1.msra.mxu0 0.0
    %117 = vmatprep.subr.mxu0 0.0
    %118 = vmatpush1.msra.mxu0 0.0
    %119 = vmatprep.subr.mxu0 0.0
    %120 = vmatpush1.msra.mxu0 0.0
    %121 = vmatprep.subr.mxu0 0.0
    %122 = vmatpush1.msra.mxu0 0.0
    %123 = vmatprep.subr.mxu0 0.0
    %124 = vmatpush1.msra.mxu0 0.0
    %125 = vmatprep.subr.mxu0 0.0
    %126 = vmatpush1.msra.mxu0 0.0
    %127 = vmatprep.subr.mxu0 0.0
    %128 = vmatpush1.msra.mxu0 0.0
    %129 = vmatprep.subr.mxu0 0.0
    %130 = vmatpush1.msra.mxu0 0.0
    %131 = vmatprep.mubr.f32.mxu0 0.0
    %132 = vmatmul.mubr.f32.gmra.mrb[0].mxu0 %v22
    %v133 = vpop.f32.mrb[0].mxu0
    %v134 = vadd.f32 %v60, %v133
    %v135 = vpop.f32.mrb[0].mxu0
    %v136 = vadd.f32 %v64, %v135
    %137 = vdwg.mxu0
    %v138 = vtanh.pop %v134
    %v139 = vtanh.pop %v136
    %v140 = vld [vmem:[%s3] sm:$0xff]
    %v141 = vld [vmem:[%s3 + $0x8] sm:$0xff]
    %v142 = vld [vmem:[%s3 + $0x10] sm:$0xff]
    %v143 = vld [vmem:[%s3 + $0x18] sm:$0xff]
    %v144 = vld [vmem:[%s3 + $0x20] sm:$0xff]
    %v145 = vld [vmem:[%s3 + $0x28] sm:$0xff]
    %v146 = vld [vmem:[%s3 + $0x30] sm:$0xff]
    %v147 = vld [vmem:[%s3 + $0x38] sm:$0xff]
    %v148 = vld [vmem:[%s3 + $0x40] sm:$0xff]
    %v149 = vld [vmem:[%s3 + $0x48] sm:$0xff]
    %v150 = vld [vmem:[%s3 + $0x50] sm:$0xff]
    %v151 = vld [vmem:[%s3 + $0x58] sm:$0xff]
    %v152 = vld [vmem:[%s3 + $0x60] sm:$0xff]
    %v153 = vld [vmem:[%s3 + $0x68] sm:$0xff]
    %v154 = vld [vmem:[%s3 + $0x70] sm:$0xff]
    %v155 = vld [vmem:[%s3 + $0x78] sm:$0xff]
    %v156 = vld [vmem:[%s3 + $0x80] sm:$0xff]
    %v157 = vld [vmem:[%s3 + $0x88] sm:$0xff]
    %v158 = vld [vmem:[%s3 + $0x90] sm:$0xff]
    %v159 = vld [vmem:[%s3 + $0x98] sm:$0xff]
    %v160 = vld [vmem:[%s3 + $0xa0] sm:$0xff]
    %v161 = vld [vmem:[%s3 + $0xa8] sm:$0xff]
    %v162 = vld [vmem:[%s3 + $0xb0] sm:$0xff]
    %v163 = vld [vmem:[%s3 + $0xb8] sm:$0xff]
    %v164 = vld [vmem:[%s3 + $0xc0] sm:$0xff]
    %v165 = vld [vmem:[%s3 + $0xc8] sm:$0xff]
    %v166 = vld [vmem:[%s3 + $0xd0] sm:$0xff]
    %v167 = vld [vmem:[%s3 + $0xd8] sm:$0xff]
    %v168 = vld [vmem:[%s3 + $0xe0] sm:$0xff]
    %v169 = vld [vmem:[%s3 + $0xe8] sm:$0xff]
    %v170 = vld [vmem:[%s3 + $0xf0] sm:$0xff]
    %v171 = vld [vmem:[%s3 + $0xf8] sm:$0xff]
    %s172 = sld [smem:[#allocation2]]
    %v173 = vstv %s172
    %174 = vmatprep.subr.mxu0 0.0
    %175 = vmatpush1.msra.mxu0 %v140
    %176 = vmatprep.subr.mxu0 0.0
    %177 = vmatpush1.msra.mxu0 %v141
    %178 = vmatprep.subr.mxu0 0.0
    %179 = vmatpush1.msra.mxu0 %v142
    %180 = vmatprep.subr.mxu0 0.0
    %181 = vmatpush1.msra.mxu0 %v143
    %182 = vmatprep.subr.mxu0 0.0
    %183 = vmatpush1.msra.mxu0 %v144
    %184 = vmatprep.subr.mxu0 0.0
    %185 = vmatpush1.msra.mxu0 %v145
    %186 = vmatprep.subr.mxu0 0.0
    %187 = vmatpush1.msra.mxu0 %v146
    %188 = vmatprep.subr.mxu0 0.0
    %189 = vmatpush1.msra.mxu0 %v147
    %190 = vmatprep.subr.mxu0 0.0
    %191 = vmatpush1.msra.mxu0 %v148
    %192 = vmatprep.subr.mxu0 0.0
    %193 = vmatpush1.msra.mxu0 %v149
    %194 = vmatprep.subr.mxu0 0.0
    %195 = vmatpush1.msra.mxu0 %v150
    %196 = vmatprep.subr.mxu0 0.0
    %197 = vmatpush1.msra.mxu0 %v151
    %198 = vmatprep.subr.mxu0 0.0
    %199 = vmatpush1.msra.mxu0 %v152
    %200 = vmatprep.subr.mxu0 0.0
    %201 = vmatpush1.msra.mxu0 %v153
    %202 = vmatprep.subr.mxu0 0.0
    %203 = vmatpush1.msra.mxu0 %v154
    %204 = vmatprep.subr.mxu0 0.0
    %205 = vmatpush1.msra.mxu0 %v155
    %206 = vmatprep.subr.mxu0 0.0
    %207 = vmatpush1.msra.mxu0 %v156
    %208 = vmatprep.subr.mxu0 0.0
    %209 = vmatpush1.msra.mxu0 %v157
    %210 = vmatprep.subr.mxu0 0.0
    %211 = vmatpush1.msra.mxu0 %v158
    %212 = vmatprep.subr.mxu0 0.0
    %213 = vmatpush1.msra.mxu0 %v159
    %214 = vmatprep.subr.mxu0 0.0
    %215 = vmatpush1.msra.mxu0 %v160
    %216 = vmatprep.subr.mxu0 0.0
    %217 = vmatpush1.msra.mxu0 %v161
    %218 = vmatprep.subr.mxu0 0.0
    %219 = vmatpush1.msra.mxu0 %v162
    %220 = vmatprep.subr.mxu0 0.0
    %221 = vmatpush1.msra.mxu0 %v163
    %222 = vmatprep.subr.mxu0 0.0
    %223 = vmatpush1.msra.mxu0 %v164
    %224 = vmatprep.subr.mxu0 0.0
    %225 = vmatpush1.msra.mxu0 %v165
    %226 = vmatprep.subr.mxu0 0.0
    %227 = vmatpush1.msra.mxu0 %v166
    %228 = vmatprep.subr.mxu0 0.0
    %229 = vmatpush1.msra.mxu0 %v167
    %230 = vmatprep.subr.mxu0 0.0
    %231 = vmatpush1.msra.mxu0 %v168
    %232 = vmatprep.subr.mxu0 0.0
    %233 = vmatpush1.msra.mxu0 %v169
    %234 = vmatprep.subr.mxu0 0.0
    %235 = vmatpush1.msra.mxu0 %v170
    %236 = vmatprep.subr.mxu0 0.0
    %237 = vmatpush1.msra.mxu0 %v171
    %238 = vmatprep.mubr.f32.mxu0 %v139
    %239 = vmatmul.mubr.f32.gmra.mrb[0].mxu0 %v138
    %v240 = vpop.f32.mrb[0].mxu0
    %v241 = vadd.f32 %v173, %v240
    %v242 = vpop.f32.mrb[0].mxu0
    %243 = vdwg.mxu0
    %vm244 = vcmask 64512
    %245 = vst.msk [vmem:[#allocation3] sm:$0xff] %vm244, %v241
    // Predicated region
    $region22: #{tpu_custom_call.1} parent=1 // pred_check
      _
    $region23: #{tpu_custom_call.1} parent=1 // pred_check_branch
      %247 = sbr.rel (0) target = $region25
    $region24: #{tpu_custom_call.1} parent=1 // pred_region
      %s249 = ssub.s32 128, 128
      %250 = vsyncadd [#allocation4], %s249
      %s252 = sshll.u32 [#allocation3], 4
      %s253 = int_to_ptr.vmem [resolvable:$true] %s252
      %255 = dma.vmem_to_hbm [thread:$0]  %s253, 128, %s5, [#allocation4]
    $region25: #{tpu_custom_call.1} parent=1 // pred_fallthru
      _
    // Predicated region
    $region26: #{tpu_custom_call.1} parent=1 // pred_check
      _
    $region27: #{tpu_custom_call.1} parent=1 // pred_check_branch
      %257 = sbr.rel (0) target = $region29
    $region28: #{tpu_custom_call.1} parent=1 // pred_region
      %258 = dma.done [#allocation4], 128
    $region29: #{tpu_custom_call.1} parent=1 // pred_fallthru
      _
    %259 = vsyncpa [#allocation4], 1

</llo_original>
